<compile_context>
chip_gen: v5e
topology: v5e:2x2
jax: 0.10.0
libtpu: 0.0.40
codegen_flags: <defaults>
</compile_context>

<pallas_src>
import functools

import jax
import jax.numpy as jnp
from jax.experimental import pallas as pl
from jax.experimental.pallas import tpu as pltpu


def _qnet_kernel(x_ref, w1_ref, b1_ref, w2_ref, b2_ref, o_ref):
    # Layer 1: fp32 x -> bf16 cast in-register (VPU, free under a mem-bound
    # kernel), MXU matmul with fp32 accumulation, fp32 bias-add + ReLU
    # epilogue (v5e-safe: no bf16 VPU there).
    x = x_ref[...].astype(w1_ref.dtype)
    h = jnp.dot(x, w1_ref[...], preferred_element_type=jnp.float32)
    h = jnp.maximum(h + b1_ref[...], 0.0)
    # Layer 2: output columns are zero-padded to 128 lanes (prepare_params),
    # so the store below is an unmasked full-lane vst.
    y = jnp.dot(h.astype(w2_ref.dtype), w2_ref[...],
                preferred_element_type=jnp.float32)
    y = y + b2_ref[...]
    o_ref[...] = y.astype(o_ref.dtype)  # bf16 store: halves output writeback


_TB = 1024  # batch-tile rows for the gridded (large-B) path


def _cost_estimate(B, in_f, hid, o_pad):
    flops = 2 * B * (in_f * hid + hid * o_pad)
    bytes_accessed = (B * in_f * 4                  # fp32 x in
                      + in_f * hid * 2 + hid * 4    # bf16 w1 + fp32 b1
                      + hid * o_pad * 2 + o_pad * 4  # bf16 w2 + fp32 b2
                      + B * o_pad * 2)              # bf16 padded out
    return pl.CostEstimate(flops=flops, transcendentals=0,
                           bytes_accessed=bytes_accessed)


@functools.partial(jax.jit, static_argnames=("out_features",))
def linear_qnet_forward(x, w1, b1, w2, b2, out_features):
    """x: (B, in) fp32; w1: (in, hid) bf16; b1: (1, hid) fp32;
    w2: (hid, o_pad) bf16 (cols zero-padded to a 128 multiple); b2: (1, o_pad) fp32.
    Returns (B, out_features) fp32."""
    B, in_f = x.shape
    hid = w1.shape[1]
    o_pad = w2.shape[1]
    ce = _cost_estimate(B, in_f, hid, o_pad)

    if B <= _TB:
        # Small batch: everything fits in a few KB of VMEM -> no grid, whole
        # array blocks, a single straight-line kernel invocation.
        y_pad = pl.pallas_call(
            _qnet_kernel,
            out_shape=jax.ShapeDtypeStruct((B, o_pad), jnp.bfloat16),
            in_specs=[pl.BlockSpec(memory_space=pltpu.MemorySpace.VMEM)] * 5,
            out_specs=pl.BlockSpec(memory_space=pltpu.MemorySpace.VMEM),
            cost_estimate=ce,
        )(x, w1, b1, w2, b2)
    else:
        # Large batch: tile only the batch axis. Weights/biases use a constant
        # block index so they stay VMEM-resident across steps; "parallel" lets
        # v7x's two TensorCores split the batch axis (no-op on v5e/v6e).
        y_pad = pl.pallas_call(
            _qnet_kernel,
            out_shape=jax.ShapeDtypeStruct((B, o_pad), jnp.bfloat16),
            grid=(pl.cdiv(B, _TB),),
            in_specs=[
                pl.BlockSpec((_TB, in_f), lambda i: (i, 0)),
                pl.BlockSpec(w1.shape, lambda i: (0, 0)),
                pl.BlockSpec(b1.shape, lambda i: (0, 0)),
                pl.BlockSpec(w2.shape, lambda i: (0, 0)),
                pl.BlockSpec(b2.shape, lambda i: (0, 0)),
            ],
            out_specs=pl.BlockSpec((_TB, o_pad), lambda i: (i, 0)),
            compiler_params=pltpu.CompilerParams(
                dimension_semantics=("parallel",)),
            cost_estimate=ce,
        )(x, w1, b1, w2, b2)

    # Slice back to the real logits; tiny and fused inside this jit.
    # (A lane-dense in-kernel packing of the 4 real outputs per 128-lane row
    #  could cut padded writeback another ~32x for very large B; not needed
    #  at these shapes.)
    return y_pad[:, :out_features].astype(jnp.float32)


def prepare_params(w1, b1, w2, b2, dtype=jnp.bfloat16):
    """Cast weights to bf16 and pad output columns to a full 128-lane multiple.

    Biases stay fp32 (negligible bytes, exact epilogue add). Padded output
    columns of w2/b2 are zero, so the padded lanes of the kernel output are
    exactly zero and the wrapper slice is the guard that drops them.
    """
    in_f, hid = w1.shape
    _, out_f = w2.shape
    o_pad = max(128, -(-out_f // 128) * 128)

    w2_p = jnp.zeros((hid, o_pad), jnp.float32).at[:, :out_f].set(w2)
    b2_p = jnp.zeros((1, o_pad), jnp.float32).at[0, :out_f].set(b2.reshape(-1))

    return (w1.astype(dtype),
            b1.reshape(1, hid).astype(jnp.float32),
            w2_p.astype(dtype),
            b2_p)


def init_params(key, input_size, hidden_size, output_size):
    """PyTorch nn.Linear-style init: U(-1/sqrt(fan_in), +1/sqrt(fan_in))."""
    k1, k2, k3, k4 = jax.random.split(key, 4)
    bound1 = 1.0 / (input_size ** 0.5)
    bound2 = 1.0 / (hidden_size ** 0.5)
    w1 = jax.random.uniform(k1, (input_size, hidden_size), jnp.float32,
                            minval=-bound1, maxval=bound1)
    b1 = jax.random.uniform(k2, (hidden_size,), jnp.float32,
                            minval=-bound1, maxval=bound1)
    w2 = jax.random.uniform(k3, (hidden_size, output_size), jnp.float32,
                            minval=-bound2, maxval=bound2)
    b2 = jax.random.uniform(k4, (output_size,), jnp.float32,
                            minval=-bound2, maxval=bound2)
    return w1, b1, w2, b2


# TODO(synk): Linear_QNet.save() (torch.save of the state dict) is host-side
# checkpoint I/O with no kernel equivalent; omitted.

if __name__ == "__main__":
    batch, input_size, hidden_size, output_size = 8, 16, 32, 4

    key = jax.random.PRNGKey(0)
    kx, kp, kb = jax.random.split(key, 3)
    x = jax.random.normal(kx, (batch, input_size), jnp.float32)
    w1, b1, w2, b2 = init_params(kp, input_size, hidden_size, output_size)
    params = prepare_params(w1, b1, w2, b2)

    out = linear_qnet_forward(x, *params, out_features=output_size)
    out = jax.block_until_ready(out)
    assert out.shape == (batch, output_size)
    assert out.dtype == jnp.float32

    # Reference 1: same bf16-in / fp32-accumulate / bf16-out math as the kernel.
    w1_b, b1_p, w2_b, b2_p = params
    h_ref = jnp.maximum(
        jnp.dot(x.astype(jnp.bfloat16), w1_b,
                preferred_element_type=jnp.float32) + b1_p, 0.0)
    y_ref = (jnp.dot(h_ref.astype(jnp.bfloat16), w2_b,
                     preferred_element_type=jnp.float32) + b2_p)
    ref_matched = y_ref.astype(jnp.bfloat16).astype(jnp.float32)[:, :output_size]
    assert jnp.allclose(out, ref_matched, atol=2e-2, rtol=2e-2)

    # Reference 2: original fp32 PyTorch-style forward (loose tolerance for the
    # bf16 matmul inputs / bf16 output store — intentional precision choice).
    ref_f32 = jnp.maximum(x @ w1 + b1, 0.0) @ w2 + b2
    assert jnp.allclose(out, ref_f32, atol=5e-2, rtol=5e-2)

    # Gridded-path check: B > _TB with a ragged last batch tile (1200 % 1024).
    big_b = 1200
    xb = jax.random.normal(kb, (big_b, input_size), jnp.float32)
    outb = jax.block_until_ready(
        linear_qnet_forward(xb, *params, out_features=output_size))
    refb = jnp.maximum(xb @ w1 + b1, 0.0) @ w2 + b2
    assert outb.shape == (big_b, output_size)
    assert jnp.allclose(outb, refb, atol=5e-2, rtol=5e-2)

    print("KERNEL_OK")
</pallas_src>

<mosaic_0001>
module attributes {stable_mosaic.version = 11 : i64} {
  func.func @_qnet_kernel(%arg0: memref<8x16xf32, #tpu.memory_space<vmem>>, %arg1: memref<16x32xbf16, #tpu.memory_space<vmem>>, %arg2: memref<1x32xf32, #tpu.memory_space<vmem>>, %arg3: memref<32x128xbf16, #tpu.memory_space<vmem>>, %arg4: memref<1x128xf32, #tpu.memory_space<vmem>>, %arg5: memref<8x128xbf16, #tpu.memory_space<vmem>>) attributes {dimension_semantics = [], scalar_prefetch = 0 : i64, scratch_operands = 0 : i64, tpu.core_type = #tpu.core_type<tc>} {
    %c0 = arith.constant 0 : index
    %c0_0 = arith.constant 0 : index
    %0 = vector.load %arg0[%c0, %c0_0] : memref<8x16xf32, #tpu.memory_space<vmem>>, vector<8x16xf32>
    %1 = arith.truncf %0 : vector<8x16xf32> to vector<8x16xbf16>
    %c0_1 = arith.constant 0 : index
    %c0_2 = arith.constant 0 : index
    %2 = vector.load %arg1[%c0_1, %c0_2] : memref<16x32xbf16, #tpu.memory_space<vmem>>, vector<16x32xbf16>
    %cst = arith.constant dense<0.000000e+00> : vector<8x32xf32>
    %3 = tpu.matmul %1, %2, %cst {dimension_numbers = #tpu.dot_dimension_numbers<[1], [0], [0], [1], [0, 0, 1, 1], [], []>} : vector<8x16xbf16>, vector<16x32xbf16>, vector<8x32xf32> -> vector<8x32xf32>
    %c0_3 = arith.constant 0 : index
    %c0_4 = arith.constant 0 : index
    %4 = vector.load %arg2[%c0_3, %c0_4] : memref<1x32xf32, #tpu.memory_space<vmem>>, vector<1x32xf32>
    %5 = vector.broadcast %4 : vector<1x32xf32> to vector<8x32xf32>
    %6 = arith.addf %3, %5 : vector<8x32xf32>
    %cst_5 = arith.constant 0.000000e+00 : f32
    %7 = vector.broadcast %cst_5 : f32 to vector<8x32xf32>
    %8 = arith.maximumf %6, %7 : vector<8x32xf32>
    %9 = arith.truncf %8 : vector<8x32xf32> to vector<8x32xbf16>
    %c0_6 = arith.constant 0 : index
    %c0_7 = arith.constant 0 : index
    %10 = vector.load %arg3[%c0_6, %c0_7] : memref<32x128xbf16, #tpu.memory_space<vmem>>, vector<32x128xbf16>
    %cst_8 = arith.constant dense<0.000000e+00> : vector<8x128xf32>
    %11 = tpu.matmul %9, %10, %cst_8 {dimension_numbers = #tpu.dot_dimension_numbers<[1], [0], [0], [1], [0, 0, 1, 1], [], []>} : vector<8x32xbf16>, vector<32x128xbf16>, vector<8x128xf32> -> vector<8x128xf32>
    %c0_9 = arith.constant 0 : index
    %c0_10 = arith.constant 0 : index
    %12 = vector.load %arg4[%c0_9, %c0_10] : memref<1x128xf32, #tpu.memory_space<vmem>>, vector<1x128xf32>
    %13 = vector.broadcast %12 : vector<1x128xf32> to vector<8x128xf32>
    %14 = arith.addf %11, %13 : vector<8x128xf32>
    %15 = arith.truncf %14 : vector<8x128xf32> to vector<8x128xbf16>
    %c0_11 = arith.constant 0 : index
    %c0_12 = arith.constant 0 : index
    %16 = vector.load %arg5[%c0_11, %c0_12] : memref<8x128xbf16, #tpu.memory_space<vmem>>, vector<8x128xbf16>
    tpu.vector_store %arg5[%c0_11, %c0_12], %15 {strides = array<i32>} : memref<8x128xbf16, #tpu.memory_space<vmem>>, vector<8x128xbf16>,
    return
  }
}

</mosaic_0001>

<llo_original>
// kernel: linear_qnet_forward.1
$region0: #{linear_qnet_forward.1}
  #allocation0 [shape = 'u32[]', space=smem, size = 0x4, offset = 0x4, fixed_abs, tag = 'smem constant byte address 0x4 - core index']
  #allocation1 [shape = 'u32[72,128]{1,0:T(1,128)}', space=vmem, size = 0x9000, scoped, tag = 'internal scratch']
  %s0 = inlined_call_operand.hbm [shape: f32[8,16], index: 0, kind: input, shape index: {}]
  %s1 = inlined_call_operand.hbm [shape: bf16[16,32], index: 1, kind: input, shape index: {}]
  %s2 = inlined_call_operand.vmem [shape: f32[1,32], index: 2, kind: input, shape index: {}]
  %s3 = inlined_call_operand.hbm [shape: bf16[32,128], index: 3, kind: input, shape index: {}]
  %s4 = inlined_call_operand.vmem [shape: f32[1,128], index: 4, kind: input, shape index: {}]
  %s5 = inlined_call_operand.vmem [shape: bf16[8,128], index: 5, kind: output, shape index: {}]
  %s6 = sld [smem:[#allocation0]]
  $region42: #{linear_qnet_forward.1} parent=0
    _
  %s8 = ssub.s32 1, %s6
  %s9 = scalar_select 0, %s8, %s6
  $region1: #{linear_qnet_forward.1} parent=0
    #allocation2 [shape = 'u8[4096]{0}', space=vmem, size = 0x1000, scoped, tag = 'input window, operand 0, single buffered']
    #allocation3 [shape = 's32[1]{0}', space=sflag, size = 0x4, scoped, tag = 'scoped memory for linear_qnet_forward.1']
    #allocation4 [shape = 'u8[4096]{0}', space=vmem, size = 0x1000, scoped, tag = 'input window, operand 1, single buffered']
    #allocation5 [shape = 's32[1]{0}', space=sflag, size = 0x4, scoped, tag = 'scoped memory for linear_qnet_forward.1']
    #allocation6 [shape = 'u8[8192]{0}', space=vmem, size = 0x2000, scoped, tag = 'input window, operand 3, single buffered']
    %10 = vsyncpa [#allocation3], 0
    %11 = vsyncpa [#allocation5], 0
    // Predicated region
    $region2: #{linear_qnet_forward.1} parent=1 // pred_check
      _
    $region3: #{linear_qnet_forward.1} parent=1 // pred_check_branch
      %13 = sbr.rel (0) target = $region5
    $region4: #{linear_qnet_forward.1} parent=1 // pred_region
      %15 = vsyncadd [#allocation3], 0
      %s17 = sshll.u32 %s0, 4
      %s18 = int_to_ptr.hbm [resolvable:$true] %s17
      %s19 = sshll.u32 [#allocation2], 4
      %s20 = int_to_ptr.vmem [resolvable:$true] %s19
      %22 = dma.hbm_to_vmem [thread:$0]  %s18, 128, %s20, [#allocation3]
    $region5: #{linear_qnet_forward.1} parent=1 // pred_fallthru
      _
    // Predicated region
    $region6: #{linear_qnet_forward.1} parent=1 // pred_check
      _
    $region7: #{linear_qnet_forward.1} parent=1 // pred_check_branch
      %24 = sbr.rel (0) target = $region9
    $region8: #{linear_qnet_forward.1} parent=1 // pred_region
      %26 = vsyncadd [#allocation5], 0
      %s27 = sshll.u32 %s1, 4
      %s28 = int_to_ptr.hbm [resolvable:$true] %s27
      %s29 = sshll.u32 [#allocation4], 4
      %s30 = int_to_ptr.vmem [resolvable:$true] %s29
      %35 = dma.hbm_to_vmem [thread:$0]  %s28, 128, %s30, [#allocation5], 64, 64, 4
    $region9: #{linear_qnet_forward.1} parent=1 // pred_fallthru
      _
    // Predicated region
    $region10: #{linear_qnet_forward.1} parent=1 // pred_check
      _
    $region11: #{linear_qnet_forward.1} parent=1 // pred_check_branch
      %37 = sbr.rel (0) target = $region13
    $region12: #{linear_qnet_forward.1} parent=1 // pred_region
      _
    $region13: #{linear_qnet_forward.1} parent=1 // pred_fallthru
      _
    // Predicated region
    $region14: #{linear_qnet_forward.1} parent=1 // pred_check
      _
    $region15: #{linear_qnet_forward.1} parent=1 // pred_check_branch
      %39 = sbr.rel (0) target = $region17
    $region16: #{linear_qnet_forward.1} parent=1 // pred_region
      %41 = vsyncadd [#allocation5], 0
      %s42 = sshll.u32 %s3, 4
      %s43 = int_to_ptr.hbm [resolvable:$true] %s42
      %s44 = sshll.u32 [#allocation6], 4
      %s45 = int_to_ptr.vmem [resolvable:$true] %s44
      %50 = dma.hbm_to_vmem [thread:$0]  %s43, 256, %s45, [#allocation5], 64, 64, 4
    $region17: #{linear_qnet_forward.1} parent=1 // pred_fallthru
      _
    // Predicated region
    $region18: #{linear_qnet_forward.1} parent=1 // pred_check
      _
    $region19: #{linear_qnet_forward.1} parent=1 // pred_check_branch
      %52 = sbr.rel (0) target = $region21
    $region20: #{linear_qnet_forward.1} parent=1 // pred_region
      _
    $region21: #{linear_qnet_forward.1} parent=1 // pred_fallthru
      _
    // Predicated region
    $region22: #{linear_qnet_forward.1} parent=1 // pred_check
      _
    $region23: #{linear_qnet_forward.1} parent=1 // pred_check_branch
      %54 = sbr.rel (0) target = $region25
    $region24: #{linear_qnet_forward.1} parent=1 // pred_region
      %56 = dma.done [#allocation3], 128
    $region25: #{linear_qnet_forward.1} parent=1 // pred_fallthru
      _
    // Predicated region
    $region26: #{linear_qnet_forward.1} parent=1 // pred_check
      _
    $region27: #{linear_qnet_forward.1} parent=1 // pred_check_branch
      %58 = sbr.rel (0) target = $region29
    $region28: #{linear_qnet_forward.1} parent=1 // pred_region
      %60 = dma.done [#allocation5], 128
    $region29: #{linear_qnet_forward.1} parent=1 // pred_fallthru
      _
    // Predicated region
    $region30: #{linear_qnet_forward.1} parent=1 // pred_check
      _
    $region31: #{linear_qnet_forward.1} parent=1 // pred_check_branch
      %62 = sbr.rel (0) target = $region33
    $region32: #{linear_qnet_forward.1} parent=1 // pred_region
      %64 = dma.done [#allocation5], 256
    $region33: #{linear_qnet_forward.1} parent=1 // pred_fallthru
      _
    %v66 = vld [vmem:[#allocation2] sm:$0xff]
    %v67 = vpack.c.bf16 %v66, %v66
    %v68 = vld [vmem:[#allocation4] sm:$0xf]
    %v69 = vld [vmem:[#allocation4 + $0x4] sm:$0xf]
    %v70 = vld [vmem:[%s2] sm:$0x1]
    %v72 = vperm.slane %v70, 0
    %v76 = vunpack.c.l.b16 %v68
    %v77 = vunpack.c.l.b16 %v69
    %v78 = vpack.c.b16 %v77, %v76
    %vm80 = vcmask 130048
    %v82 = vsel %vm80, %v67, 0
    %84 = vmatpush.bf16.msra.mxu0 0
    %85 = vmatpush.bf16.msra.mxu0 0
    %86 = vmatpush.bf16.msra.mxu0 0
    %87 = vmatpush.bf16.msra.mxu0 0
    %88 = vmatpush.bf16.msra.mxu0 0
    %89 = vmatpush.bf16.msra.mxu0 0
    %90 = vmatpush.bf16.msra.mxu0 0
    %91 = vmatpush.bf16.msra.mxu0 %v78
    %92 = vmatmul.bf16.gmra.mxu0 %v82
    %v93 = vpop.f32.mrf.mxu0
    %v94 = vadd.f32 %v72, %v93
    %v95 = vpop.f32.mrf.mxu0
    %96 = vdwg.mxu0
    %v97 = vmax.f32 %v94, 0.0
    %v98 = vpack.c.bf16 %v97, %v97
    %v99 = vld [vmem:[#allocation6] sm:$0xf]
    %v100 = vld [vmem:[#allocation6 + $0x4] sm:$0xf]
    %v101 = vld [vmem:[#allocation6 + $0x8] sm:$0xf]
    %v102 = vld [vmem:[#allocation6 + $0xc] sm:$0xf]
    %v103 = vld [vmem:[%s4] sm:$0x1]
    %v105 = vperm.slane %v103, 0
    %v111 = vunpack.c.l.b16 %v99
    %v112 = vunpack.c.l.b16 %v100
    %v113 = vunpack.c.l.b16 %v101
    %v114 = vunpack.c.l.b16 %v102
    %v115 = vpack.c.b16 %v112, %v111
    %v116 = vpack.c.b16 %v114, %v113
    %vm119 = vcmask 261120
    %v121 = vsel %vm119, %v98, 0
    %123 = vmatpush.bf16.msra.mxu0 0
    %124 = vmatpush.bf16.msra.mxu0 0
    %125 = vmatpush.bf16.msra.mxu0 0
    %126 = vmatpush.bf16.msra.mxu0 0
    %127 = vmatpush.bf16.msra.mxu0 0
    %128 = vmatpush.bf16.msra.mxu0 0
    %129 = vmatpush.bf16.msra.mxu0 %v116
    %130 = vmatpush.bf16.msra.mxu0 %v115
    %131 = vmatmul.bf16.gmra.mxu0 %v121
    %v132 = vpop.f32.mrf.mxu0
    %v133 = vadd.f32 %v105, %v132
    %v134 = vpop.f32.mrf.mxu0
    %135 = vdwg.mxu0
    %v136 = vpack.c.bf16 %v133, %v133
    %137 = vst [vmem:[%s5] sm:$0xf] %v136
    // Predicated region
    $region34: #{linear_qnet_forward.1} parent=1 // pred_check
      _
    $region35: #{linear_qnet_forward.1} parent=1 // pred_check_branch
      %139 = sbr.rel (0) target = $region37
    $region36: #{linear_qnet_forward.1} parent=1 // pred_region
      _
    $region37: #{linear_qnet_forward.1} parent=1 // pred_fallthru
      _
    // Predicated region
    $region38: #{linear_qnet_forward.1} parent=1 // pred_check
      _
    $region39: #{linear_qnet_forward.1} parent=1 // pred_check_branch
      %141 = sbr.rel (0) target = $region41
    $region40: #{linear_qnet_forward.1} parent=1 // pred_region
      _
    $region41: #{linear_qnet_forward.1} parent=1 // pred_fallthru
      _
    %142 = vsyncpa [#allocation3], 1
    %143 = vsyncpa [#allocation5], 1

</llo_original>
